<compile_context>
chip_gen: v5e
topology: v5e:2x2
jax: 0.10.0
libtpu: 0.0.40
codegen_flags: <defaults>
</compile_context>

<pallas_src>
import functools

import jax
import jax.numpy as jnp
from jax.experimental import pallas as pl
from jax.experimental.pallas import tpu as pltpu

LANE = 128


def _round_up(x, m):
    return (x + m - 1) // m * m


def _vmem_capacity_bytes(default=64 * 1024 * 1024):
    """Physical VMEM per TensorCore; falls back to the smallest modern value."""
    try:
        info = pltpu.get_tpu_info()
        for name in ("vmem_capacity_bytes", "vmem_size_bytes", "vmem_bytes"):
            v = getattr(info, name, None)
            if v:
                return int(v)
    except Exception:
        pass
    return default


def _folded_mlp_logsoftmax_kernel(x_ref, w_ref, b_ref, o_ref, *, n_classes):
    """One batch tile: bf16 matmul (f32 accum) + bias + masked log_softmax."""
    x = x_ref[...].astype(jnp.bfloat16)                     # in-kernel cast (VPU)
    logits = jnp.dot(x, w_ref[...], preferred_element_type=jnp.float32)
    logits = logits + b_ref[...]                            # f32 bias add

    # Padded class lanes -> very negative (mask, never slice: keeps the tile a
    # single lane-dense vreg row; pad lanes vanish under exp()).
    lane = jax.lax.broadcasted_iota(jnp.int32, logits.shape, dimension=1)
    logits = jnp.where(lane < n_classes, logits, jnp.float32(-1e30))

    # Numerically stable log_softmax over the last axis (exp/log on the EUP).
    m = jnp.max(logits, axis=-1, keepdims=True)
    shifted = logits - m
    lse = jnp.log(jnp.sum(jnp.exp(shifted), axis=-1, keepdims=True))
    o_ref[...] = shifted - lse


def prepare_scale_dnn_params(params):
    """One-time prep: fold the 5 affine layers into one effective layer (f32).

    PyTorch-style (out, in) weights.  y = (((x@W1.T+b1)@W2.T+b2)...)@W5.T+b5
    == x @ W_eff + b_eff with W_eff = W1.T@...@W5.T (784, 10).  The output dim
    is zero-padded to 128 lanes; the folded weight is cast to bf16 (MXU
    native), the bias stays f32 as (1, 128).
    """
    w_eff = None
    b_eff = None
    for w, bias in params:
        w = jnp.asarray(w, jnp.float32).T                   # (in, out)
        bias = jnp.asarray(bias, jnp.float32)
        if w_eff is None:
            w_eff, b_eff = w, bias
        else:
            w_eff = w_eff @ w
            b_eff = b_eff @ w + bias

    in_dim, out_dim = w_eff.shape                           # (784, 10)
    out_pad = _round_up(out_dim, LANE)                      # 128
    w_p = jnp.zeros((in_dim, out_pad), jnp.float32).at[:, :out_dim].set(w_eff)
    b_p = jnp.zeros((1, out_pad), jnp.float32).at[0, :out_dim].set(b_eff)
    return (w_p.astype(jnp.bfloat16), b_p)


def scale_dnn_forward(x, prepped, *, n_classes=10, batch_tile=None):
    """x: (B, C, H, W) float32 (NCHW, like PyTorch). Returns (B, 10) log-probs."""
    w_p, b_p = prepped
    b = x.shape[0]
    in_dim = w_p.shape[0]                                   # 784
    out_pad = w_p.shape[1]                                  # 128 (padded classes)

    # Glue: x.view(B, -1).  Stays f32 — the bf16 cast happens inside the kernel.
    x2d = x.reshape(b, -1)

    # Batch tile: multiple of 16 (bf16 sublane packing), 16..512, and >= 2 grid
    # steps whenever B > 16 so the "parallel" axis can be megacore-split.
    if batch_tile is None:
        batch_tile = max(16, min(512, _round_up(pl.cdiv(b, 2), 16)))
    tb = max(16, _round_up(min(batch_tile, b), 16))
    b_pad = _round_up(b, tb)
    if b_pad != b:
        x2d = jnp.pad(x2d, ((0, b_pad - b), (0, 0)))
    grid = (b_pad // tb,)

    # Cost estimate for XLA's scheduler.
    flops = 2 * b_pad * in_dim * out_pad
    bytes_accessed = (b_pad * in_dim * 4                    # x (f32)
                      + w_p.size * w_p.dtype.itemsize       # folded weight (bf16)
                      + b_p.size * b_p.dtype.itemsize       # bias (f32)
                      + b_pad * out_pad * 4)                # output (f32)
    cost = pl.CostEstimate(flops=flops,
                           transcendentals=b_pad * (out_pad + 1),
                           bytes_accessed=bytes_accessed)

    # Exact VMEM budget, capped below the physical per-core capacity.
    weight_bytes = (w_p.size * w_p.dtype.itemsize + b_p.size * b_p.dtype.itemsize)
    tile_bytes = tb * in_dim * 4 + tb * out_pad * 4
    need = 2 * weight_bytes + 2 * tile_bytes + (8 << 20)    # dbl-buf + scratch
    vmem_cap = _vmem_capacity_bytes()
    vmem_limit = int(min(max(need, 16 << 20), int(vmem_cap * 0.75)))

    kernel = functools.partial(_folded_mlp_logsoftmax_kernel, n_classes=n_classes)
    out = pl.pallas_call(
        kernel,
        out_shape=jax.ShapeDtypeStruct((b_pad, out_pad), jnp.float32),
        grid=grid,
        in_specs=[
            pl.BlockSpec((tb, in_dim), lambda i: (i, 0)),    # x tile
            pl.BlockSpec(w_p.shape, lambda i: (0, 0)),       # folded W, resident
            pl.BlockSpec(b_p.shape, lambda i: (0, 0)),       # folded b, resident
        ],
        out_specs=pl.BlockSpec((tb, out_pad), lambda i: (i, 0)),
        compiler_params=pltpu.CompilerParams(
            dimension_semantics=("parallel",),               # megacore batch split
            vmem_limit_bytes=vmem_limit),
        cost_estimate=cost,
    )(x2d, w_p, b_p)

    return out[:b, :n_classes]


def init_scale_dnn_params(key, start_num):
    """Deterministic init mirroring nn.Linear default (U(-1/sqrt(in), 1/sqrt(in)))."""
    dims = [28 * 28, start_num, start_num * 2, start_num * 4, start_num * 8, 10]
    params = []
    for i in range(5):
        fan_in, fan_out = dims[i], dims[i + 1]
        key, kw, kb = jax.random.split(key, 3)
        bound = 1.0 / (fan_in ** 0.5)
        w = jax.random.uniform(kw, (fan_out, fan_in), jnp.float32, -bound, bound)
        bias = jax.random.uniform(kb, (fan_out,), jnp.float32, -bound, bound)
        params.append((w, bias))
    return params


def _reference_forward(x, params):
    """Pure-JAX f32 reference of the PyTorch forward (layer-by-layer)."""
    h = x.reshape(x.shape[0], -1).astype(jnp.float32)
    for w, bb in params:
        h = h @ jnp.asarray(w, jnp.float32).T + jnp.asarray(bb, jnp.float32)
    return jax.nn.log_softmax(h, axis=-1)


if __name__ == "__main__":
    key = jax.random.PRNGKey(0)
    k_param, k_x = jax.random.split(key)

    start_num = 16                  # small scale: 784 -> 16 -> 32 -> 64 -> 128 -> 10
    batch = 128
    params = init_scale_dnn_params(k_param, start_num)
    prepped = prepare_scale_dnn_params(params)     # one-time: fold/transpose/pad

    # MNIST-like input: NCHW (B, 1, 28, 28)
    x = jax.random.normal(k_x, (batch, 1, 28, 28), jnp.float32)

    fwd = jax.jit(scale_dnn_forward)

    # Even batch: tb=64, 2 grid steps (megacore-splittable).
    out = jax.block_until_ready(fwd(x, prepped))
    ref = _reference_forward(x, params)
    assert out.shape == (batch, 10)
    assert jnp.allclose(out, ref, atol=2e-2, rtol=2e-2), "mismatch vs reference"

    # Ragged batch: exercises zero-padding of the batch axis + class-lane mask.
    x_small = x[:50]
    out_small = jax.block_until_ready(fwd(x_small, prepped))
    ref_small = _reference_forward(x_small, params)
    assert out_small.shape == (50, 10)
    assert jnp.allclose(out_small, ref_small, atol=2e-2, rtol=2e-2), "ragged mismatch"

    print("KERNEL_OK")
</pallas_src>

<mosaic_0001>
module attributes {stable_mosaic.version = 11 : i64} {
  func.func @_folded_mlp_logsoftmax_kernel(%arg0: i32, %arg1: memref<64x784xf32, #tpu.memory_space<vmem>>, %arg2: memref<784x128xbf16, #tpu.memory_space<vmem>>, %arg3: memref<1x128xf32, #tpu.memory_space<vmem>>, %arg4: memref<64x128xf32, #tpu.memory_space<vmem>>) attributes {dimension_semantics = [#tpu.dimension_semantics<parallel>], iteration_bounds = array<i64: 2>, scalar_prefetch = 0 : i64, scratch_operands = 0 : i64, tpu.core_type = #tpu.core_type<tc>, window_params = [{transform_indices = @transform_0, window_bounds = array<i64: 64, 784>}, {pipeline_mode = #tpu.pipeline_mode<synchronous>, transform_indices = @transform_1, window_bounds = array<i64: 784, 128>}, {pipeline_mode = #tpu.pipeline_mode<synchronous>, transform_indices = @transform_2, window_bounds = array<i64: 1, 128>}, {transform_indices = @transform_3, window_bounds = array<i64: 64, 128>}]} {
    %c0 = arith.constant 0 : index
    %c0_0 = arith.constant 0 : index
    %0 = vector.load %arg1[%c0, %c0_0] : memref<64x784xf32, #tpu.memory_space<vmem>>, vector<64x784xf32>
    %1 = arith.truncf %0 : vector<64x784xf32> to vector<64x784xbf16>
    %c0_1 = arith.constant 0 : index
    %c0_2 = arith.constant 0 : index
    %2 = vector.load %arg2[%c0_1, %c0_2] : memref<784x128xbf16, #tpu.memory_space<vmem>>, vector<784x128xbf16>
    %cst = arith.constant dense<0.000000e+00> : vector<64x128xf32>
    %3 = tpu.matmul %1, %2, %cst {dimension_numbers = #tpu.dot_dimension_numbers<[1], [0], [0], [1], [0, 0, 1, 1], [], []>} : vector<64x784xbf16>, vector<784x128xbf16>, vector<64x128xf32> -> vector<64x128xf32>
    %c0_3 = arith.constant 0 : index
    %c0_4 = arith.constant 0 : index
    %4 = vector.load %arg3[%c0_3, %c0_4] : memref<1x128xf32, #tpu.memory_space<vmem>>, vector<1x128xf32>
    %5 = vector.broadcast %4 : vector<1x128xf32> to vector<64x128xf32>
    %6 = arith.addf %3, %5 : vector<64x128xf32>
    %7 = tpu.iota {dimensions = array<i32: 1>} : vector<64x128xi32>
    %c10_i32 = arith.constant 10 : i32
    %8 = vector.broadcast %c10_i32 : i32 to vector<64x128xi32>
    %9 = arith.cmpi slt, %7, %8 : vector<64x128xi32>
    %cst_5 = arith.constant -1.000000e+30 : f32
    %10 = vector.broadcast %cst_5 : f32 to vector<64x128xf32>
    %11 = arith.select %9, %6, %10 : vector<64x128xi1>, vector<64x128xf32>
    %cst_6 = arith.constant dense<0xFF800000> : vector<64xf32>
    %12 = vector.multi_reduction <maximumf>, %11, %cst_6 [1] : vector<64x128xf32> to vector<64xf32>
    %13 = vector.shape_cast %12 : vector<64xf32> to vector<64x1xf32>
    %14 = vector.broadcast %13 : vector<64x1xf32> to vector<64x128xf32>
    %15 = arith.subf %11, %14 : vector<64x128xf32>
    %16 = math.exp %15 : vector<64x128xf32>
    %cst_7 = arith.constant dense<0.000000e+00> : vector<64xf32>
    %17 = vector.multi_reduction <add>, %16, %cst_7 [1] : vector<64x128xf32> to vector<64xf32>
    %18 = vector.shape_cast %17 : vector<64xf32> to vector<64x1xf32>
    %19 = math.log %18 : vector<64x1xf32>
    %20 = vector.broadcast %19 : vector<64x1xf32> to vector<64x128xf32>
    %21 = arith.subf %15, %20 : vector<64x128xf32>
    %c0_8 = arith.constant 0 : index
    %c0_9 = arith.constant 0 : index
    %22 = vector.load %arg4[%c0_8, %c0_9] : memref<64x128xf32, #tpu.memory_space<vmem>>, vector<64x128xf32>
    tpu.vector_store %arg4[%c0_8, %c0_9], %21 {strides = array<i32>} : memref<64x128xf32, #tpu.memory_space<vmem>>, vector<64x128xf32>,
    return
  }
  func.func @transform_0(%arg0: i32) -> (i32, i32) {
    %c0_i32 = arith.constant 0 : i32
    %c0_i32_0 = arith.constant 0 : i32
    return %arg0, %c0_i32 : i32, i32
  }
  func.func @transform_1(%arg0: i32) -> (i32, i32) {
    %c0_i32 = arith.constant 0 : i32
    %c0_i32_0 = arith.constant 0 : i32
    %c0_i32_1 = arith.constant 0 : i32
    return %c0_i32, %c0_i32_0 : i32, i32
  }
  func.func @transform_2(%arg0: i32) -> (i32, i32) {
    %c0_i32 = arith.constant 0 : i32
    %c0_i32_0 = arith.constant 0 : i32
    %c0_i32_1 = arith.constant 0 : i32
    return %c0_i32, %c0_i32_0 : i32, i32
  }
  func.func @transform_3(%arg0: i32) -> (i32, i32) {
    %c0_i32 = arith.constant 0 : i32
    %c0_i32_0 = arith.constant 0 : i32
    return %arg0, %c0_i32 : i32, i32
  }
}

</mosaic_0001>

<llo_original>
// kernel: scale_dnn_forward.1
$region0: #{scale_dnn_forward.1}
  #allocation0 [shape = 'u32[]', space=smem, size = 0x4, offset = 0x4, fixed_abs, tag = 'smem constant byte address 0x4 - core index']
  #allocation1 [shape = 'u32[72,128]{1,0:T(1,128)}', space=vmem, size = 0x9000, scoped, tag = 'internal scratch']
  %s0 = inlined_call_operand.vmem [shape: f32[128,784], index: 0, kind: input, shape index: {}]
  %s1 = inlined_call_operand.vmem [shape: bf16[784,128], index: 1, kind: input, shape index: {}]
  %s2 = inlined_call_operand.vmem [shape: f32[1,128], index: 2, kind: input, shape index: {}]
  %s3 = inlined_call_operand.vmem [shape: f32[128,128], index: 3, kind: output, shape index: {}]
  %s4 = sld [smem:[#allocation0]]
  $region45: #{scale_dnn_forward.1} parent=0
    _
  %s6 = ssub.s32 1, %s4
  %s7 = scalar_select 0, %s6, %s4
  loop: start=0, step=1, limit=4
  $region2: #{scale_dnn_forward.1} parent=0 // loop_pre_header
    _
  $region3: #{scale_dnn_forward.1} parent=0 // loop_header
    %s9 = sphi 0, %s13
    %p10 = scmp.ge.s32.totalorder %s9, 4
    %s19 = sphi 0, %s21
    %s22 = sphi 0, %s19
    %s23 = sphi 0, %s22
    %s39 = sphi 0, %s23
    %s43 = sphi 0, %s43
    %s45 = sphi 0, %s43
    %s46 = sphi 0, %s45
    %s60 = sphi 0, %s46
    %s64 = sphi 0, %s64
    %s66 = sphi 0, %s64
    %s67 = sphi 0, %s66
    %s81 = sphi 0, %s67
    %s87 = sphi 0, %s89
    %s90 = sphi 0, %s87
    %s91 = sphi 0, %s90
    %s107 = sphi 0, %s91
  $region4: #{scale_dnn_forward.1} parent=0 // loop_header_branch
    %12 = sbr.rel (%p10) target = $region8
  $region5: #{scale_dnn_forward.1} parent=0 // loop_body
    %s14 = ssub.s32 %s9, 1
    %s15 = ssub.s32 %s9, 2
    %s16 = sadd.s32 %s9, 1
    %s17 = ssub.s32 %s9, %s16
    %p18 = scmp.eq.s32.totalorder %s17, 0
    %s20 = sadd.s32 %s19, 1
    %s21 = scalar_select %p18, %s19, %s20
    %p24 = pneg %p18
    %p25 = scmp.eq.s32.totalorder %s9, 1
    %p26 = por %p24, %p25
    %p27 = scmp.ne.s32.totalorder %s19, %s22
    %p28 = scmp.eq.s32.totalorder %s9, 0
    %p29 = por %p27, %p28
    %p30 = scmp.ne.s32.totalorder %s19, %s22
    %p31 = scmp.eq.s32.totalorder %s14, 1
    %p32 = por %p30, %p31
    %p33 = scmp.ne.s32.totalorder %s22, %s23
    %p34 = scmp.eq.s32.totalorder %s14, 0
    %p35 = por %p33, %p34
    %p36 = scmp.ne.s32.totalorder %s22, %s23
    %p37 = scmp.eq.s32.totalorder %s15, 1
    %p38 = por %p36, %p37
    %p40 = scmp.ne.s32.totalorder %s23, %s39
    %p41 = scmp.eq.s32.totalorder %s15, 0
    %p42 = por %p40, %p41
    %s44 = sadd.s32 %s43, 1
    %p47 = scmp.eq.s32.totalorder %s9, 1
    %p48 = scmp.ne.s32.totalorder %s43, %s45
    %p49 = scmp.eq.s32.totalorder %s9, 0
    %p50 = por %p48, %p49
    %p51 = scmp.ne.s32.totalorder %s43, %s45
    %p52 = scmp.eq.s32.totalorder %s14, 1
    %p53 = por %p51, %p52
    %p54 = scmp.ne.s32.totalorder %s45, %s46
    %p55 = scmp.eq.s32.totalorder %s14, 0
    %p56 = por %p54, %p55
    %p57 = scmp.ne.s32.totalorder %s45, %s46
    %p58 = scmp.eq.s32.totalorder %s15, 1
    %p59 = por %p57, %p58
    %p61 = scmp.ne.s32.totalorder %s46, %s60
    %p62 = scmp.eq.s32.totalorder %s15, 0
    %p63 = por %p61, %p62
    %s65 = sadd.s32 %s64, 1
    %p68 = scmp.eq.s32.totalorder %s9, 1
    %p69 = scmp.ne.s32.totalorder %s64, %s66
    %p70 = scmp.eq.s32.totalorder %s9, 0
    %p71 = por %p69, %p70
    %p72 = scmp.ne.s32.totalorder %s64, %s66
    %p73 = scmp.eq.s32.totalorder %s14, 1
    %p74 = por %p72, %p73
    %p75 = scmp.ne.s32.totalorder %s66, %s67
    %p76 = scmp.eq.s32.totalorder %s14, 0
    %p77 = por %p75, %p76
    %p78 = scmp.ne.s32.totalorder %s66, %s67
    %p79 = scmp.eq.s32.totalorder %s15, 1
    %p80 = por %p78, %p79
    %p82 = scmp.ne.s32.totalorder %s67, %s81
    %p83 = scmp.eq.s32.totalorder %s15, 0
    %p84 = por %p82, %p83
    %s85 = ssub.s32 %s9, %s16
    %p86 = scmp.eq.s32.totalorder %s85, 0
    %s88 = sadd.s32 %s87, 1
    %s89 = scalar_select %p86, %s87, %s88
    %p92 = pneg %p86
    %p93 = scmp.eq.s32.totalorder %s9, 1
    %p94 = por %p92, %p93
    %p95 = scmp.ne.s32.totalorder %s87, %s90
    %p96 = scmp.eq.s32.totalorder %s9, 0
    %p97 = por %p95, %p96
    %p98 = scmp.ne.s32.totalorder %s87, %s90
    %p99 = scmp.eq.s32.totalorder %s14, 1
    %p100 = por %p98, %p99
    %p101 = scmp.ne.s32.totalorder %s90, %s91
    %p102 = scmp.eq.s32.totalorder %s14, 0
    %p103 = por %p101, %p102
    %p104 = scmp.ne.s32.totalorder %s90, %s91
    %p105 = scmp.eq.s32.totalorder %s15, 1
    %p106 = por %p104, %p105
    %p108 = scmp.ne.s32.totalorder %s91, %s107
    %p109 = scmp.eq.s32.totalorder %s15, 0
    %p110 = por %p108, %p109
    %p111 = scmp.le.s32.totalorder 1, %s9
    %p112 = scmp.lt.s32.totalorder %s9, 3
    %p113 = pnand %p111, %p112
    %p114 = pneg %p113
    // Predicated region
    $region9: #{scale_dnn_forward.1} parent=5 // pred_check
      _
    $region10: #{scale_dnn_forward.1} parent=5 // pred_check_branch
      %116 = sbr.rel (%p113) target = $region12
    $region11: #{scale_dnn_forward.1} parent=5 // pred_region
      %s117 = ssub.s32 %s9, 1
      // Predicated region
      $region13: #{scale_dnn_forward.1} parent=11 // pred_check
        %p118 = pneg %p56
      $region14: #{scale_dnn_forward.1} parent=11 // pred_check_branch
        %120 = sbr.rel (%p118) target = $region16
      $region15: #{scale_dnn_forward.1} parent=11 // pred_region
        _
      $region16: #{scale_dnn_forward.1} parent=11 // pred_fallthru
        _
      // Predicated region
      $region17: #{scale_dnn_forward.1} parent=11 // pred_check
        %p121 = pneg %p77
      $region18: #{scale_dnn_forward.1} parent=11 // pred_check_branch
        %123 = sbr.rel (%p121) target = $region20
      $region19: #{scale_dnn_forward.1} parent=11 // pred_region
        _
      $region20: #{scale_dnn_forward.1} parent=11 // pred_fallthru
        _
    $region12: #{scale_dnn_forward.1} parent=5 // pred_fallthru
      _
    %p124 = scmp.lt.s32.totalorder %s9, 2
    // Predicated region
    $region21: #{scale_dnn_forward.1} parent=5 // pred_check
      %p125 = pneg %p124
    $region22: #{scale_dnn_forward.1} parent=5 // pred_check_branch
      %127 = sbr.rel (%p125) target = $region24
    $region23: #{scale_dnn_forward.1} parent=5 // pred_region
      // Predicated region
      $region25: #{scale_dnn_forward.1} parent=23 // pred_check
        %p128 = pneg %p29
      $region26: #{scale_dnn_forward.1} parent=23 // pred_check_branch
        %130 = sbr.rel (%p128) target = $region28
      $region27: #{scale_dnn_forward.1} parent=23 // pred_region
        %s131 = smul.u32 8, %s9
        %p132 = scmp.lt.s32.totalorder %s131, 15
        %s133 = scalar_select %p132, %s131, 15
        %s134 = smul.addr %s133, 7
        %s135 = smul.addr %s134, 8
        %s136 = scalar_lea.vmem %s0, %s135
        %s137 = smul.u32 8, %s9
      $region28: #{scale_dnn_forward.1} parent=23 // pred_fallthru
        _
    $region24: #{scale_dnn_forward.1} parent=5 // pred_fallthru
      _
    %p138 = scmp.le.s32.totalorder 1, %s9
    %p139 = scmp.lt.s32.totalorder %s9, 3
    %p140 = pnand %p138, %p139
    %p141 = pneg %p140
    // Predicated region
    $region29: #{scale_dnn_forward.1} parent=5 // pred_check
      _
    $region30: #{scale_dnn_forward.1} parent=5 // pred_check_branch
      %143 = sbr.rel (%p140) target = $region32
    $region31: #{scale_dnn_forward.1} parent=5 // pred_region
      %s144 = ssub.s32 %s9, 1
      %s145 = smul.u32 8, %s14
      %p146 = scmp.lt.s32.totalorder %s145, 15
      %s147 = scalar_select %p146, %s145, 15
      %s148 = smul.addr %s147, 7
      %s149 = smul.addr %s148, 8
      %s150 = scalar_lea.vmem %s0, %s149
      %p151 = pneg %p35
      %p152 = pneg %p32
      %p153 = pneg %p56
      %p154 = pneg %p53
      %p155 = pneg %p77
      %p156 = pneg %p74
      %p157 = pneg %p103
      %p158 = pneg %p100
      %s159 = smul.u32 8, %s14
      %p160 = scmp.lt.s32.totalorder %s159, 15
      %s161 = scalar_select %p160, %s159, 15
      %s162 = smul.addr %s161, 8
      %s163 = scalar_lea.vmem %s3, %s162
      %s164 = smul.u32 8, %s14
      %p165 = scmp.lt.s32.totalorder %s164, 15
      %s166 = scalar_select %p165, %s164, 15
      %s167 = smul.addr %s166, 7
      %s168 = smul.addr %s167, 8
      %s169 = scalar_lea.vmem %s0, %s168
      %s170 = smul.u32 8, %s14
      %s171 = smul.u32 8, %s14
      %p172 = scmp.lt.s32.totalorder %s171, 15
      %s173 = scalar_select %p172, %s171, 15
      %s174 = smul.addr %s173, 8
      %s175 = scalar_lea.vmem %s3, %s174
      %s176 = smul.u32 8, %s14
      %v178 = vld [vmem:[%s169] sm:$0xff]
      %v179 = vld [vmem:[%s169 + $0x8] sm:$0xff]
      %v180 = vld [vmem:[%s169 + $0x10] sm:$0xff]
      %v181 = vld [vmem:[%s169 + $0x18] sm:$0xff]
      %v182 = vld [vmem:[%s169 + $0x20] sm:$0xff]
      %v183 = vld [vmem:[%s169 + $0x28] sm:$0xff]
      %v184 = vld [vmem:[%s169 + $0x30] sm:$0xff]
      %v185 = vld [vmem:[%s169 + $0x38] sm:$0xff]
      %v186 = vld [vmem:[%s169 + $0x40] sm:$0xff]
      %v187 = vld [vmem:[%s169 + $0x48] sm:$0xff]
      %v188 = vld [vmem:[%s169 + $0x50] sm:$0xff]
      %v189 = vld [vmem:[%s169 + $0x58] sm:$0xff]
      %v190 = vld [vmem:[%s169 + $0x60] sm:$0xff]
      %v191 = vld [vmem:[%s169 + $0x68] sm:$0xff]
      %v192 = vld [vmem:[%s169 + $0x70] sm:$0xff]
      %v193 = vld [vmem:[%s169 + $0x78] sm:$0xff]
      %v194 = vld [vmem:[%s169 + $0x80] sm:$0xff]
      %v195 = vld [vmem:[%s169 + $0x88] sm:$0xff]
      %v196 = vld [vmem:[%s169 + $0x90] sm:$0xff]
      %v197 = vld [vmem:[%s169 + $0x98] sm:$0xff]
      %v198 = vld [vmem:[%s169 + $0xa0] sm:$0xff]
      %v199 = vld [vmem:[%s169 + $0xa8] sm:$0xff]
      %v200 = vld [vmem:[%s169 + $0xb0] sm:$0xff]
      %v201 = vld [vmem:[%s169 + $0xb8] sm:$0xff]
      %v202 = vld [vmem:[%s169 + $0xc0] sm:$0xff]
      %v203 = vld [vmem:[%s169 + $0xc8] sm:$0xff]
      %v204 = vld [vmem:[%s169 + $0xd0] sm:$0xff]
      %v205 = vld [vmem:[%s169 + $0xd8] sm:$0xff]
      %v206 = vld [vmem:[%s169 + $0xe0] sm:$0xff]
      %v207 = vld [vmem:[%s169 + $0xe8] sm:$0xff]
      %v208 = vld [vmem:[%s169 + $0xf0] sm:$0xff]
      %v209 = vld [vmem:[%s169 + $0xf8] sm:$0xff]
      %v210 = vld [vmem:[%s169 + $0x100] sm:$0xff]
      %v211 = vld [vmem:[%s169 + $0x108] sm:$0xff]
      %v212 = vld [vmem:[%s169 + $0x110] sm:$0xff]
      %v213 = vld [vmem:[%s169 + $0x118] sm:$0xff]
      %v214 = vld [vmem:[%s169 + $0x120] sm:$0xff]
      %v215 = vld [vmem:[%s169 + $0x128] sm:$0xff]
      %v216 = vld [vmem:[%s169 + $0x130] sm:$0xff]
      %v217 = vld [vmem:[%s169 + $0x138] sm:$0xff]
      %v218 = vld [vmem:[%s169 + $0x140] sm:$0xff]
      %v219 = vld [vmem:[%s169 + $0x148] sm:$0xff]
      %v220 = vld [vmem:[%s169 + $0x150] sm:$0xff]
      %v221 = vld [vmem:[%s169 + $0x158] sm:$0xff]
      %v222 = vld [vmem:[%s169 + $0x160] sm:$0xff]
      %v223 = vld [vmem:[%s169 + $0x168] sm:$0xff]
      %v224 = vld [vmem:[%s169 + $0x170] sm:$0xff]
      %v225 = vld [vmem:[%s169 + $0x178] sm:$0xff]
      %v226 = vld [vmem:[%s169 + $0x180] sm:$0xff]
      %v227 = vld [vmem:[%s169 + $0x188] sm:$0xff]
      %v228 = vld [vmem:[%s169 + $0x190] sm:$0xff]
      %v229 = vld [vmem:[%s169 + $0x198] sm:$0xff]
      %v230 = vld [vmem:[%s169 + $0x1a0] sm:$0xff]
      %v231 = vld [vmem:[%s169 + $0x1a8] sm:$0xff]
      %v232 = vld [vmem:[%s169 + $0x1b0] sm:$0xff]
      %v233 = vld [vmem:[%s169 + $0x1b8] sm:$0xff]
      %v234 = vpack.c.bf16 %v185, %v178
      %v235 = vpack.c.bf16 %v186, %v179
      %v236 = vpack.c.bf16 %v187, %v180
      %v237 = vpack.c.bf16 %v188, %v181
      %v238 = vpack.c.bf16 %v189, %v182
      %v239 = vpack.c.bf16 %v190, %v183
      %v240 = vpack.c.bf16 %v191, %v184
      %v241 = vpack.c.bf16 %v199, %v192
      %v242 = vpack.c.bf16 %v200, %v193
      %v243 = vpack.c.bf16 %v201, %v194
      %v244 = vpack.c.bf16 %v202, %v195
      %v245 = vpack.c.bf16 %v203, %v196
      %v246 = vpack.c.bf16 %v204, %v197
      %v247 = vpack.c.bf16 %v205, %v198
      %v248 = vpack.c.bf16 %v213, %v206
      %v249 = vpack.c.bf16 %v214, %v207
      %v250 = vpack.c.bf16 %v215, %v208
      %v251 = vpack.c.bf16 %v216, %v209
      %v252 = vpack.c.bf16 %v217, %v210
      %v253 = vpack.c.bf16 %v218, %v211
      %v254 = vpack.c.bf16 %v219, %v212
      %v255 = vpack.c.bf16 %v227, %v220
      %v256 = vpack.c.bf16 %v228, %v221
      %v257 = vpack.c.bf16 %v229, %v222
      %v258 = vpack.c.bf16 %v230, %v223
      %v259 = vpack.c.bf16 %v231, %v224
      %v260 = vpack.c.bf16 %v232, %v225
      %v261 = vpack.c.bf16 %v233, %v226
      %v262 = vld [vmem:[%s1] sm:$0xf]
      %v263 = vld [vmem:[%s1 + $0x4] sm:$0xf]
      %v264 = vld [vmem:[%s1 + $0x8] sm:$0xf]
      %v265 = vld [vmem:[%s1 + $0xc] sm:$0xf]
      %v266 = vld [vmem:[%s1 + $0x10] sm:$0xf]
      %v267 = vld [vmem:[%s1 + $0x14] sm:$0xf]
      %v268 = vld [vmem:[%s1 + $0x18] sm:$0xf]
      %v269 = vld [vmem:[%s1 + $0x1c] sm:$0xf]
      %v270 = vld [vmem:[%s1 + $0x20] sm:$0xf]
      %v271 = vld [vmem:[%s1 + $0x24] sm:$0xf]
      %v272 = vld [vmem:[%s1 + $0x28] sm:$0xf]
      %v273 = vld [vmem:[%s1 + $0x2c] sm:$0xf]
      %v274 = vld [vmem:[%s1 + $0x30] sm:$0xf]
      %v275 = vld [vmem:[%s1 + $0x34] sm:$0xf]
      %v276 = vld [vmem:[%s1 + $0x38] sm:$0xf]
      %v277 = vld [vmem:[%s1 + $0x3c] sm:$0xf]
      %v278 = vld [vmem:[%s1 + $0x40] sm:$0xf]
      %v279 = vld [vmem:[%s1 + $0x44] sm:$0xf]
      %v280 = vld [vmem:[%s1 + $0x48] sm:$0xf]
      %v281 = vld [vmem:[%s1 + $0x4c] sm:$0xf]
      %v282 = vld [vmem:[%s1 + $0x50] sm:$0xf]
      %v283 = vld [vmem:[%s1 + $0x54] sm:$0xf]
      %v284 = vld [vmem:[%s1 + $0x58] sm:$0xf]
      %v285 = vld [vmem:[%s1 + $0x5c] sm:$0xf]
      %v286 = vld [vmem:[%s1 + $0x60] sm:$0xf]
      %v287 = vld [vmem:[%s1 + $0x64] sm:$0xf]
      %v288 = vld [vmem:[%s1 + $0x68] sm:$0xf]
      %v289 = vld [vmem:[%s1 + $0x6c] sm:$0xf]
      %v290 = vld [vmem:[%s1 + $0x70] sm:$0xf]
      %v291 = vld [vmem:[%s1 + $0x74] sm:$0xf]
      %v292 = vld [vmem:[%s1 + $0x78] sm:$0xf]
      %v293 = vld [vmem:[%s1 + $0x7c] sm:$0xf]
      %v294 = vld [vmem:[%s1 + $0x80] sm:$0xf]
      %v295 = vld [vmem:[%s1 + $0x84] sm:$0xf]
      %v296 = vld [vmem:[%s1 + $0x88] sm:$0xf]
      %v297 = vld [vmem:[%s1 + $0x8c] sm:$0xf]
      %v298 = vld [vmem:[%s1 + $0x90] sm:$0xf]
      %v299 = vld [vmem:[%s1 + $0x94] sm:$0xf]
      %v300 = vld [vmem:[%s1 + $0x98] sm:$0xf]
      %v301 = vld [vmem:[%s1 + $0x9c] sm:$0xf]
      %v302 = vld [vmem:[%s1 + $0xa0] sm:$0xf]
      %v303 = vld [vmem:[%s1 + $0xa4] sm:$0xf]
      %v304 = vld [vmem:[%s1 + $0xa8] sm:$0xf]
      %v305 = vld [vmem:[%s1 + $0xac] sm:$0xf]
      %v306 = vld [vmem:[%s1 + $0xb0] sm:$0xf]
      %v307 = vld [vmem:[%s1 + $0xb4] sm:$0xf]
      %v308 = vld [vmem:[%s1 + $0xb8] sm:$0xf]
      %v309 = vld [vmem:[%s1 + $0xbc] sm:$0xf]
      %v310 = vld [vmem:[%s1 + $0xc0] sm:$0xf]
      %v311 = vld [vmem:[%s1 + $0xc4] sm:$0xf]
      %v312 = vld [vmem:[%s1 + $0xc8] sm:$0xf]
      %v313 = vld [vmem:[%s1 + $0xcc] sm:$0xf]
      %v314 = vld [vmem:[%s1 + $0xd0] sm:$0xf]
      %v315 = vld [vmem:[%s1 + $0xd4] sm:$0xf]
      %v316 = vld [vmem:[%s1 + $0xd8] sm:$0xf]
      %v317 = vld [vmem:[%s1 + $0xdc] sm:$0xf]
      %v318 = vld [vmem:[%s1 + $0xe0] sm:$0xf]
      %v319 = vld [vmem:[%s1 + $0xe4] sm:$0xf]
      %v320 = vld [vmem:[%s1 + $0xe8] sm:$0xf]
      %v321 = vld [vmem:[%s1 + $0xec] sm:$0xf]
      %v322 = vld [vmem:[%s1 + $0xf0] sm:$0xf]
      %v323 = vld [vmem:[%s1 + $0xf4] sm:$0xf]
      %v324 = vld [vmem:[%s1 + $0xf8] sm:$0xf]
      %v325 = vld [vmem:[%s1 + $0xfc] sm:$0xf]
      %v326 = vld [vmem:[%s1 + $0x100] sm:$0xf]
      %v327 = vld [vmem:[%s1 + $0x104] sm:$0xf]
      %v328 = vld [vmem:[%s1 + $0x108] sm:$0xf]
      %v329 = vld [vmem:[%s1 + $0x10c] sm:$0xf]
      %v330 = vld [vmem:[%s1 + $0x110] sm:$0xf]
      %v331 = vld [vmem:[%s1 + $0x114] sm:$0xf]
      %v332 = vld [vmem:[%s1 + $0x118] sm:$0xf]
      %v333 = vld [vmem:[%s1 + $0x11c] sm:$0xf]
      %v334 = vld [vmem:[%s1 + $0x120] sm:$0xf]
      %v335 = vld [vmem:[%s1 + $0x124] sm:$0xf]
      %v336 = vld [vmem:[%s1 + $0x128] sm:$0xf]
      %v337 = vld [vmem:[%s1 + $0x12c] sm:$0xf]
      %v338 = vld [vmem:[%s1 + $0x130] sm:$0xf]
      %v339 = vld [vmem:[%s1 + $0x134] sm:$0xf]
      %v340 = vld [vmem:[%s1 + $0x138] sm:$0xf]
      %v341 = vld [vmem:[%s1 + $0x13c] sm:$0xf]
      %v342 = vld [vmem:[%s1 + $0x140] sm:$0xf]
      %v343 = vld [vmem:[%s1 + $0x144] sm:$0xf]
      %v344 = vld [vmem:[%s1 + $0x148] sm:$0xf]
      %v345 = vld [vmem:[%s1 + $0x14c] sm:$0xf]
      %v346 = vld [vmem:[%s1 + $0x150] sm:$0xf]
      %v347 = vld [vmem:[%s1 + $0x154] sm:$0xf]
      %v348 = vld [vmem:[%s1 + $0x158] sm:$0xf]
      %v349 = vld [vmem:[%s1 + $0x15c] sm:$0xf]
      %v350 = vld [vmem:[%s1 + $0x160] sm:$0xf]
      %v351 = vld [vmem:[%s1 + $0x164] sm:$0xf]
      %v352 = vld [vmem:[%s1 + $0x168] sm:$0xf]
      %v353 = vld [vmem:[%s1 + $0x16c] sm:$0xf]
      %v354 = vld [vmem:[%s1 + $0x170] sm:$0xf]
      %v355 = vld [vmem:[%s1 + $0x174] sm:$0xf]
      %v356 = vld [vmem:[%s1 + $0x178] sm:$0xf]
      %v357 = vld [vmem:[%s1 + $0x17c] sm:$0xf]
      %v358 = vld [vmem:[%s1 + $0x180] sm:$0xf]
      %v359 = vld [vmem:[%s1 + $0x184] sm:$0xf]
      %v360 = vld [vmem:[%s2] sm:$0x1]
      %v362 = vperm.slane %v360, 0
      %v462 = vunpack.c.l.b16 %v262
      %v463 = vunpack.c.l.b16 %v263
      %v464 = vunpack.c.l.b16 %v264
      %v465 = vunpack.c.l.b16 %v265
      %v466 = vunpack.c.l.b16 %v266
      %v467 = vunpack.c.l.b16 %v267
      %v468 = vunpack.c.l.b16 %v268
      %v469 = vunpack.c.l.b16 %v269
      %v470 = vunpack.c.l.b16 %v270
      %v471 = vunpack.c.l.b16 %v271
      %v472 = vunpack.c.l.b16 %v272
      %v473 = vunpack.c.l.b16 %v273
      %v474 = vunpack.c.l.b16 %v274
      %v475 = vunpack.c.l.b16 %v275
      %v476 = vunpack.c.l.b16 %v276
      %v477 = vunpack.c.l.b16 %v277
      %v478 = vunpack.c.l.b16 %v278
      %v479 = vunpack.c.l.b16 %v279
      %v480 = vunpack.c.l.b16 %v280
      %v481 = vunpack.c.l.b16 %v281
      %v482 = vunpack.c.l.b16 %v282
      %v483 = vunpack.c.l.b16 %v283
      %v484 = vunpack.c.l.b16 %v284
      %v485 = vunpack.c.l.b16 %v285
      %v486 = vunpack.c.l.b16 %v286
      %v487 = vunpack.c.l.b16 %v287
      %v488 = vunpack.c.l.b16 %v288
      %v489 = vunpack.c.l.b16 %v289
      %v490 = vunpack.c.l.b16 %v290
      %v491 = vunpack.c.l.b16 %v291
      %v492 = vunpack.c.l.b16 %v292
      %v493 = vunpack.c.l.b16 %v293
      %v494 = vunpack.c.l.b16 %v294
      %v495 = vunpack.c.l.b16 %v295
      %v496 = vunpack.c.l.b16 %v296
      %v497 = vunpack.c.l.b16 %v297
      %v498 = vunpack.c.l.b16 %v298
      %v499 = vunpack.c.l.b16 %v299
      %v500 = vunpack.c.l.b16 %v300
      %v501 = vunpack.c.l.b16 %v301
      %v502 = vunpack.c.l.b16 %v302
      %v503 = vunpack.c.l.b16 %v303
      %v504 = vunpack.c.l.b16 %v304
      %v505 = vunpack.c.l.b16 %v305
      %v506 = vunpack.c.l.b16 %v306
      %v507 = vunpack.c.l.b16 %v307
      %v508 = vunpack.c.l.b16 %v308
      %v509 = vunpack.c.l.b16 %v309
      %v510 = vunpack.c.l.b16 %v310
      %v511 = vunpack.c.l.b16 %v311
      %v512 = vunpack.c.l.b16 %v312
      %v513 = vunpack.c.l.b16 %v313
      %v514 = vunpack.c.l.b16 %v314
      %v515 = vunpack.c.l.b16 %v315
      %v516 = vunpack.c.l.b16 %v316
      %v517 = vunpack.c.l.b16 %v317
      %v518 = vunpack.c.l.b16 %v318
      %v519 = vunpack.c.l.b16 %v319
      %v520 = vunpack.c.l.b16 %v320
      %v521 = vunpack.c.l.b16 %v321
      %v522 = vunpack.c.l.b16 %v322
      %v523 = vunpack.c.l.b16 %v323
      %v524 = vunpack.c.l.b16 %v324
      %v525 = vunpack.c.l.b16 %v325
      %v526 = vunpack.c.l.b16 %v326
      %v527 = vunpack.c.l.b16 %v327
      %v528 = vunpack.c.l.b16 %v328
      %v529 = vunpack.c.l.b16 %v329
      %v530 = vunpack.c.l.b16 %v330
      %v531 = vunpack.c.l.b16 %v331
      %v532 = vunpack.c.l.b16 %v332
      %v533 = vunpack.c.l.b16 %v333
      %v534 = vunpack.c.l.b16 %v334
      %v535 = vunpack.c.l.b16 %v335
      %v536 = vunpack.c.l.b16 %v336
      %v537 = vunpack.c.l.b16 %v337
      %v538 = vunpack.c.l.b16 %v338
      %v539 = vunpack.c.l.b16 %v339
      %v540 = vunpack.c.l.b16 %v340
      %v541 = vunpack.c.l.b16 %v341
      %v542 = vunpack.c.l.b16 %v342
      %v543 = vunpack.c.l.b16 %v343
      %v544 = vunpack.c.l.b16 %v344
      %v545 = vunpack.c.l.b16 %v345
      %v546 = vunpack.c.l.b16 %v346
      %v547 = vunpack.c.l.b16 %v347
      %v548 = vunpack.c.l.b16 %v348
      %v549 = vunpack.c.l.b16 %v349
      %v550 = vunpack.c.l.b16 %v350
      %v551 = vunpack.c.l.b16 %v351
      %v552 = vunpack.c.l.b16 %v352
      %v553 = vunpack.c.l.b16 %v353
      %v554 = vunpack.c.l.b16 %v354
      %v555 = vunpack.c.l.b16 %v355
      %v556 = vunpack.c.l.b16 %v356
      %v557 = vunpack.c.l.b16 %v357
      %v558 = vunpack.c.l.b16 %v358
      %v559 = vunpack.c.l.b16 %v359
      %v560 = vpack.c.b16 %v463, %v462
      %v561 = vpack.c.b16 %v465, %v464
      %v562 = vpack.c.b16 %v467, %v466
      %v563 = vpack.c.b16 %v469, %v468
      %v564 = vpack.c.b16 %v471, %v470
      %v565 = vpack.c.b16 %v473, %v472
      %v566 = vpack.c.b16 %v475, %v474
      %v567 = vpack.c.b16 %v477, %v476
      %v568 = vpack.c.b16 %v479, %v478
      %v569 = vpack.c.b16 %v481, %v480
      %v570 = vpack.c.b16 %v483, %v482
      %v571 = vpack.c.b16 %v485, %v484
      %v572 = vpack.c.b16 %v487, %v486
      %v573 = vpack.c.b16 %v489, %v488
      %v574 = vpack.c.b16 %v491, %v490
      %v575 = vpack.c.b16 %v493, %v492
      %v576 = vpack.c.b16 %v495, %v494
      %v577 = vpack.c.b16 %v497, %v496
      %v578 = vpack.c.b16 %v499, %v498
      %v579 = vpack.c.b16 %v501, %v500
      %v580 = vpack.c.b16 %v503, %v502
      %v581 = vpack.c.b16 %v505, %v504
      %v582 = vpack.c.b16 %v507, %v506
      %v583 = vpack.c.b16 %v509, %v508
      %v584 = vpack.c.b16 %v511, %v510
      %v585 = vpack.c.b16 %v513, %v512
      %v586 = vpack.c.b16 %v515, %v514
      %v587 = vpack.c.b16 %v517, %v516
      %v588 = vpack.c.b16 %v519, %v518
      %v589 = vpack.c.b16 %v521, %v520
      %v590 = vpack.c.b16 %v523, %v522
      %v591 = vpack.c.b16 %v525, %v524
      %v592 = vpack.c.b16 %v527, %v526
      %v593 = vpack.c.b16 %v529, %v528
      %v594 = vpack.c.b16 %v531, %v530
      %v595 = vpack.c.b16 %v533, %v532
      %v596 = vpack.c.b16 %v535, %v534
      %v597 = vpack.c.b16 %v537, %v536
      %v598 = vpack.c.b16 %v539, %v538
      %v599 = vpack.c.b16 %v541, %v540
      %v600 = vpack.c.b16 %v543, %v542
      %v601 = vpack.c.b16 %v545, %v544
      %v602 = vpack.c.b16 %v547, %v546
      %v603 = vpack.c.b16 %v549, %v548
      %v604 = vpack.c.b16 %v551, %v550
      %v605 = vpack.c.b16 %v553, %v552
      %v606 = vpack.c.b16 %v555, %v554
      %v607 = vpack.c.b16 %v557, %v556
      %v608 = vpack.c.b16 %v559, %v558
      %vm658 = vcmask 130048
      %v660 = vsel %vm658, %v240, 0
      %v663 = vsel %vm658, %v247, 0
      %v666 = vsel %vm658, %v254, 0
      %v669 = vsel %vm658, %v261, 0
      %671 = vmatpush.bf16.msra.mxu0 %v567
      %672 = vmatpush.bf16.msra.mxu0 %v566
      %673 = vmatpush.bf16.msra.mxu0 %v565
      %674 = vmatpush.bf16.msra.mxu0 %v564
      %675 = vmatpush.bf16.msra.mxu0 %v563
      %676 = vmatpush.bf16.msra.mxu0 %v562
      %677 = vmatpush.bf16.msra.mxu0 %v561
      %678 = vmatpush.bf16.msra.mxu0 %v560
      %679 = vmatmul.bf16.gmra.mxu0 %v234
      %v680 = vpop.f32.mrf.mxu0
      %v681 = vadd.f32 %v362, %v680
      %v682 = vpop.f32.mrf.mxu0
      %v683 = vadd.f32 %v362, %v682
      %684 = vmatmul.bf16.gmra.mxu0 %v241
      %v685 = vpop.f32.mrf.mxu0
      %v686 = vadd.f32 %v362, %v685
      %v687 = vpop.f32.mrf.mxu0
      %v688 = vadd.f32 %v362, %v687
      %689 = vmatmul.bf16.gmra.mxu0 %v248
      %v690 = vpop.f32.mrf.mxu0
      %v691 = vadd.f32 %v362, %v690
      %v692 = vpop.f32.mrf.mxu0
      %v693 = vadd.f32 %v362, %v692
      %694 = vmatmul.bf16.gmra.mxu0 %v255
      %v695 = vpop.f32.mrf.mxu0
      %v696 = vadd.f32 %v362, %v695
      %v697 = vpop.f32.mrf.mxu0
      %v698 = vadd.f32 %v362, %v697
      %699 = vdwg.mxu0
      %700 = vmatpush.bf16.msra.mxu0 %v575
      %701 = vmatpush.bf16.msra.mxu0 %v574
      %702 = vmatpush.bf16.msra.mxu0 %v573
      %703 = vmatpush.bf16.msra.mxu0 %v572
      %704 = vmatpush.bf16.msra.mxu0 %v571
      %705 = vmatpush.bf16.msra.mxu0 %v570
      %706 = vmatpush.bf16.msra.mxu0 %v569
      %707 = vmatpush.bf16.msra.mxu0 %v568
      %708 = vmatmul.bf16.gmra.mxu0 %v235
      %v709 = vpop.f32.mrf.mxu0
      %v710 = vadd.f32 %v681, %v709
      %v711 = vpop.f32.mrf.mxu0
      %v712 = vadd.f32 %v683, %v711
      %713 = vmatmul.bf16.gmra.mxu0 %v242
      %v714 = vpop.f32.mrf.mxu0
      %v715 = vadd.f32 %v686, %v714
      %v716 = vpop.f32.mrf.mxu0
      %v717 = vadd.f32 %v688, %v716
      %718 = vmatmul.bf16.gmra.mxu0 %v249
      %v719 = vpop.f32.mrf.mxu0
      %v720 = vadd.f32 %v691, %v719
      %v721 = vpop.f32.mrf.mxu0
      %v722 = vadd.f32 %v693, %v721
      %723 = vmatmul.bf16.gmra.mxu0 %v256
      %v724 = vpop.f32.mrf.mxu0
      %v725 = vadd.f32 %v696, %v724
      %v726 = vpop.f32.mrf.mxu0
      %v727 = vadd.f32 %v698, %v726
      %728 = vdwg.mxu0
      %729 = vmatpush.bf16.msra.mxu0 %v583
      %730 = vmatpush.bf16.msra.mxu0 %v582
      %731 = vmatpush.bf16.msra.mxu0 %v581
      %732 = vmatpush.bf16.msra.mxu0 %v580
      %733 = vmatpush.bf16.msra.mxu0 %v579
      %734 = vmatpush.bf16.msra.mxu0 %v578
      %735 = vmatpush.bf16.msra.mxu0 %v577
      %736 = vmatpush.bf16.msra.mxu0 %v576
      %737 = vmatmul.bf16.gmra.mxu0 %v236
      %v738 = vpop.f32.mrf.mxu0
      %v739 = vadd.f32 %v710, %v738
      %v740 = vpop.f32.mrf.mxu0
      %v741 = vadd.f32 %v712, %v740
      %742 = vmatmul.bf16.gmra.mxu0 %v243
      %v743 = vpop.f32.mrf.mxu0
      %v744 = vadd.f32 %v715, %v743
      %v745 = vpop.f32.mrf.mxu0
      %v746 = vadd.f32 %v717, %v745
      %747 = vmatmul.bf16.gmra.mxu0 %v250
      %v748 = vpop.f32.mrf.mxu0
      %v749 = vadd.f32 %v720, %v748
      %v750 = vpop.f32.mrf.mxu0
      %v751 = vadd.f32 %v722, %v750
      %752 = vmatmul.bf16.gmra.mxu0 %v257
      %v753 = vpop.f32.mrf.mxu0
      %v754 = vadd.f32 %v725, %v753
      %v755 = vpop.f32.mrf.mxu0
      %v756 = vadd.f32 %v727, %v755
      %757 = vdwg.mxu0
      %758 = vmatpush.bf16.msra.mxu0 %v591
      %759 = vmatpush.bf16.msra.mxu0 %v590
      %760 = vmatpush.bf16.msra.mxu0 %v589
      %761 = vmatpush.bf16.msra.mxu0 %v588
      %762 = vmatpush.bf16.msra.mxu0 %v587
      %763 = vmatpush.bf16.msra.mxu0 %v586
      %764 = vmatpush.bf16.msra.mxu0 %v585
      %765 = vmatpush.bf16.msra.mxu0 %v584
      %766 = vmatmul.bf16.gmra.mxu0 %v237
      %v767 = vpop.f32.mrf.mxu0
      %v768 = vadd.f32 %v739, %v767
      %v769 = vpop.f32.mrf.mxu0
      %v770 = vadd.f32 %v741, %v769
      %771 = vmatmul.bf16.gmra.mxu0 %v244
      %v772 = vpop.f32.mrf.mxu0
      %v773 = vadd.f32 %v744, %v772
      %v774 = vpop.f32.mrf.mxu0
      %v775 = vadd.f32 %v746, %v774
      %776 = vmatmul.bf16.gmra.mxu0 %v251
      %v777 = vpop.f32.mrf.mxu0
      %v778 = vadd.f32 %v749, %v777
      %v779 = vpop.f32.mrf.mxu0
      %v780 = vadd.f32 %v751, %v779
      %781 = vmatmul.bf16.gmra.mxu0 %v258
      %v782 = vpop.f32.mrf.mxu0
      %v783 = vadd.f32 %v754, %v782
      %v784 = vpop.f32.mrf.mxu0
      %v785 = vadd.f32 %v756, %v784
      %786 = vdwg.mxu0
      %787 = vmatpush.bf16.msra.mxu0 %v599
      %788 = vmatpush.bf16.msra.mxu0 %v598
      %789 = vmatpush.bf16.msra.mxu0 %v597
      %790 = vmatpush.bf16.msra.mxu0 %v596
      %791 = vmatpush.bf16.msra.mxu0 %v595
      %792 = vmatpush.bf16.msra.mxu0 %v594
      %793 = vmatpush.bf16.msra.mxu0 %v593
      %794 = vmatpush.bf16.msra.mxu0 %v592
      %795 = vmatmul.bf16.gmra.mxu0 %v238
      %v796 = vpop.f32.mrf.mxu0
      %v797 = vadd.f32 %v768, %v796
      %v798 = vpop.f32.mrf.mxu0
      %v799 = vadd.f32 %v770, %v798
      %800 = vmatmul.bf16.gmra.mxu0 %v245
      %v801 = vpop.f32.mrf.mxu0
      %v802 = vadd.f32 %v773, %v801
      %v803 = vpop.f32.mrf.mxu0
      %v804 = vadd.f32 %v775, %v803
      %805 = vmatmul.bf16.gmra.mxu0 %v252
      %v806 = vpop.f32.mrf.mxu0
      %v807 = vadd.f32 %v778, %v806
      %v808 = vpop.f32.mrf.mxu0
      %v809 = vadd.f32 %v780, %v808
      %810 = vmatmul.bf16.gmra.mxu0 %v259
      %v811 = vpop.f32.mrf.mxu0
      %v812 = vadd.f32 %v783, %v811
      %v813 = vpop.f32.mrf.mxu0
      %v814 = vadd.f32 %v785, %v813
      %815 = vdwg.mxu0
      %816 = vmatpush.bf16.msra.mxu0 %v607
      %817 = vmatpush.bf16.msra.mxu0 %v606
      %818 = vmatpush.bf16.msra.mxu0 %v605
      %819 = vmatpush.bf16.msra.mxu0 %v604
      %820 = vmatpush.bf16.msra.mxu0 %v603
      %821 = vmatpush.bf16.msra.mxu0 %v602
      %822 = vmatpush.bf16.msra.mxu0 %v601
      %823 = vmatpush.bf16.msra.mxu0 %v600
      %824 = vmatmul.bf16.gmra.mxu0 %v239
      %v825 = vpop.f32.mrf.mxu0
      %v826 = vadd.f32 %v797, %v825
      %v827 = vpop.f32.mrf.mxu0
      %v828 = vadd.f32 %v799, %v827
      %829 = vmatmul.bf16.gmra.mxu0 %v246
      %v830 = vpop.f32.mrf.mxu0
      %v831 = vadd.f32 %v802, %v830
      %v832 = vpop.f32.mrf.mxu0
      %v833 = vadd.f32 %v804, %v832
      %834 = vmatmul.bf16.gmra.mxu0 %v253
      %v835 = vpop.f32.mrf.mxu0
      %v836 = vadd.f32 %v807, %v835
      %v837 = vpop.f32.mrf.mxu0
      %v838 = vadd.f32 %v809, %v837
      %839 = vmatmul.bf16.gmra.mxu0 %v260
      %v840 = vpop.f32.mrf.mxu0
      %v841 = vadd.f32 %v812, %v840
      %v842 = vpop.f32.mrf.mxu0
      %v843 = vadd.f32 %v814, %v842
      %844 = vdwg.mxu0
      %845 = vmatpush.bf16.msra.mxu0 0
      %846 = vmatpush.bf16.msra.mxu0 0
      %847 = vmatpush.bf16.msra.mxu0 0
      %848 = vmatpush.bf16.msra.mxu0 0
      %849 = vmatpush.bf16.msra.mxu0 0
      %850 = vmatpush.bf16.msra.mxu0 0
      %851 = vmatpush.bf16.msra.mxu0 0
      %852 = vmatpush.bf16.msra.mxu0 %v608
      %853 = vmatmul.bf16.gmra.mxu0 %v660
      %v854 = vpop.f32.mrf.mxu0
      %v855 = vadd.f32 %v826, %v854
      %v856 = vpop.f32.mrf.mxu0
      %v857 = vadd.f32 %v828, %v856
      %858 = vmatmul.bf16.gmra.mxu0 %v663
      %v859 = vpop.f32.mrf.mxu0
      %v860 = vadd.f32 %v831, %v859
      %v861 = vpop.f32.mrf.mxu0
      %v862 = vadd.f32 %v833, %v861
      %863 = vmatmul.bf16.gmra.mxu0 %v666
      %v864 = vpop.f32.mrf.mxu0
      %v865 = vadd.f32 %v836, %v864
      %v866 = vpop.f32.mrf.mxu0
      %v867 = vadd.f32 %v838, %v866
      %868 = vmatmul.bf16.gmra.mxu0 %v669
      %v869 = vpop.f32.mrf.mxu0
      %v870 = vadd.f32 %v841, %v869
      %v871 = vpop.f32.mrf.mxu0
      %v872 = vadd.f32 %v843, %v871
      %873 = vdwg.mxu0
      %v874 = vlaneseq
      %v875 = vand.u32 %v874, 127
      %vm876 = vcmp.lt.s32.totalorder %v875, 10
      %v877 = vsel %vm876, %v855, -1e+30
      %v878 = vsel %vm876, %v857, -1e+30
      %v879 = vsel %vm876, %v860, -1e+30
      %v880 = vsel %vm876, %v862, -1e+30
      %v881 = vsel %vm876, %v865, -1e+30
      %v882 = vsel %vm876, %v867, -1e+30
      %v883 = vsel %vm876, %v870, -1e+30
      %v884 = vsel %vm876, %v872, -1e+30
      %885 = vmax.xlane.f32.xlu0 %v877
      %v886 = vpop.xlane.xlu0 %885
      %887 = vmax.xlane.f32.xlu0 %v878
      %v888 = vpop.xlane.xlu0 %887
      %889 = vmax.xlane.f32.xlu0 %v879
      %v890 = vpop.xlane.xlu0 %889
      %891 = vmax.xlane.f32.xlu0 %v880
      %v892 = vpop.xlane.xlu0 %891
      %893 = vmax.xlane.f32.xlu0 %v881
      %v894 = vpop.xlane.xlu0 %893
      %895 = vmax.xlane.f32.xlu0 %v882
      %v896 = vpop.xlane.xlu0 %895
      %897 = vmax.xlane.f32.xlu0 %v883
      %v898 = vpop.xlane.xlu0 %897
      %899 = vmax.xlane.f32.xlu0 %v884
      %v900 = vpop.xlane.xlu0 %899
      %v901 = vsub.f32 %v877, %v886
      %v902 = vsub.f32 %v878, %v888
      %v903 = vsub.f32 %v879, %v890
      %v904 = vsub.f32 %v880, %v892
      %v905 = vsub.f32 %v881, %v894
      %v906 = vsub.f32 %v882, %v896
      %v907 = vsub.f32 %v883, %v898
      %v908 = vsub.f32 %v884, %v900
      %v909 = vmul.f32 %v901, 1.442695
      %v910 = vpow.pop %v909
      %v911 = vmul.f32 %v902, 1.442695
      %v912 = vpow.pop %v911
      %v913 = vmul.f32 %v903, 1.442695
      %v914 = vpow.pop %v913
      %v915 = vmul.f32 %v904, 1.442695
      %v916 = vpow.pop %v915
      %v917 = vmul.f32 %v905, 1.442695
      %v918 = vpow.pop %v917
      %v919 = vmul.f32 %v906, 1.442695
      %v920 = vpow.pop %v919
      %v921 = vmul.f32 %v907, 1.442695
      %v922 = vpow.pop %v921
      %v923 = vmul.f32 %v908, 1.442695
      %v924 = vpow.pop %v923
      %925 = vadd.xlane.f32.xlu0 %v910
      %v926 = vpop.xlane.xlu0 %925
      %927 = vadd.xlane.f32.xlu0 %v912
      %v928 = vpop.xlane.xlu0 %927
      %929 = vadd.xlane.f32.xlu0 %v914
      %v930 = vpop.xlane.xlu0 %929
      %931 = vadd.xlane.f32.xlu0 %v916
      %v932 = vpop.xlane.xlu0 %931
      %933 = vadd.xlane.f32.xlu0 %v918
      %v934 = vpop.xlane.xlu0 %933
      %935 = vadd.xlane.f32.xlu0 %v920
      %v936 = vpop.xlane.xlu0 %935
      %937 = vadd.xlane.f32.xlu0 %v922
      %v938 = vpop.xlane.xlu0 %937
      %939 = vadd.xlane.f32.xlu0 %v924
      %v940 = vpop.xlane.xlu0 %939
      %v941 = vlog2.pop %v926
      %v942 = vmul.f32 %v941, 0.6931472
      %v943 = vlog2.pop %v928
      %v944 = vmul.f32 %v943, 0.6931472
      %v945 = vlog2.pop %v930
      %v946 = vmul.f32 %v945, 0.6931472
      %v947 = vlog2.pop %v932
      %v948 = vmul.f32 %v947, 0.6931472
      %v949 = vlog2.pop %v934
      %v950 = vmul.f32 %v949, 0.6931472
      %v951 = vlog2.pop %v936
      %v952 = vmul.f32 %v951, 0.6931472
      %v953 = vlog2.pop %v938
      %v954 = vmul.f32 %v953, 0.6931472
      %v955 = vlog2.pop %v940
      %v956 = vmul.f32 %v955, 0.6931472
      %v957 = vsub.f32 %v901, %v942
      %v958 = vsub.f32 %v902, %v944
      %v959 = vsub.f32 %v903, %v946
      %v960 = vsub.f32 %v904, %v948
      %v961 = vsub.f32 %v905, %v950
      %v962 = vsub.f32 %v906, %v952
      %v963 = vsub.f32 %v907, %v954
      %v964 = vsub.f32 %v908, %v956
      %965 = vst [vmem:[%s175] sm:$0xff] %v957
      %966 = vst [vmem:[%s175 + $0x8] sm:$0xff] %v958
      %967 = vst [vmem:[%s175 + $0x10] sm:$0xff] %v959
      %968 = vst [vmem:[%s175 + $0x18] sm:$0xff] %v960
      %969 = vst [vmem:[%s175 + $0x20] sm:$0xff] %v961
      %970 = vst [vmem:[%s175 + $0x28] sm:$0xff] %v962
      %971 = vst [vmem:[%s175 + $0x30] sm:$0xff] %v963
      %972 = vst [vmem:[%s175 + $0x38] sm:$0xff] %v964
      %s973 = smul.u32 8, %s14
      %p974 = scmp.lt.s32.totalorder %s973, 15
      %s975 = scalar_select %p974, %s973, 15
      %s976 = smul.addr %s975, 8
      %s977 = scalar_lea.vmem %s3, %s976
      // Predicated region
      $region33: #{scale_dnn_forward.1} parent=31 // pred_check
        %p978 = pneg %p100
      $region34: #{scale_dnn_forward.1} parent=31 // pred_check_branch
        %980 = sbr.rel (%p978) target = $region36
      $region35: #{scale_dnn_forward.1} parent=31 // pred_region
        %s981 = smul.u32 8, %s14
      $region36: #{scale_dnn_forward.1} parent=31 // pred_fallthru
        _
    $region32: #{scale_dnn_forward.1} parent=5 // pred_fallthru
      _
    %p982 = scmp.le.s32.totalorder 2, %s9
    // Predicated region
    $region37: #{scale_dnn_forward.1} parent=5 // pred_check
      %p983 = pneg %p982
    $region38: #{scale_dnn_forward.1} parent=5 // pred_check_branch
      %985 = sbr.rel (%p983) target = $region40
    $region39: #{scale_dnn_forward.1} parent=5 // pred_region
      %s986 = ssub.s32 %s9, 2
      // Predicated region
      $region41: #{scale_dnn_forward.1} parent=39 // pred_check
        %p987 = pneg %p106
      $region42: #{scale_dnn_forward.1} parent=39 // pred_check_branch
        %989 = sbr.rel (%p987) target = $region44
      $region43: #{scale_dnn_forward.1} parent=39 // pred_region
        %s990 = smul.u32 8, %s15
        %p991 = scmp.lt.s32.totalorder %s990, 15
        %s992 = scalar_select %p991, %s990, 15
        %s993 = smul.addr %s992, 8
        %s994 = scalar_lea.vmem %s3, %s993
      $region44: #{scale_dnn_forward.1} parent=39 // pred_fallthru
        _
    $region40: #{scale_dnn_forward.1} parent=5 // pred_fallthru
      _
  $region6: #{scale_dnn_forward.1} parent=0 // loop_footer
    %s13 = sadd.s32 1, %s9
  $region7: #{scale_dnn_forward.1} parent=0 // loop_footer_branch
    %8 = sbr.rel target = $region3
  $region8: #{scale_dnn_forward.1} parent=0 // loop_exit
    _

</llo_original>
